<compile_context>
chip_gen: v5e
topology: v5e:2x2
jax: 0.10.0
libtpu: 0.0.40
codegen_flags: <defaults>
</compile_context>

<pallas_src>
import functools

import jax
import jax.numpy as jnp
from jax.experimental import pallas as pl
from jax.experimental.pallas import tpu as pltpu


# ----------------------------------------------------------------------------
# Pallas kernel: fused actor+critic towers + value head, one batch tile.
# ----------------------------------------------------------------------------
def _mlp_base_kernel(x_ref, w1_ref, b1_ref, w2_ref, b2_ref, wcl_ref, bcl_ref,
                     actor_ref, value_ref, *, act_dtype):
    hidden = actor_ref.shape[-1]

    # In-kernel cast of x to the MXU operand dtype (free on the VALU slot);
    # x is DMA'd from HBM exactly once in its original dtype.
    x = x_ref[...].astype(w1_ref.dtype)

    # Fused first layers of both towers: one (TB, 2H) MXU matmul, f32 acc,
    # f32 bias add, tanh in act_dtype (bf16 EUP on v6e/v7x, f32 on v5e).
    h1 = jnp.tanh(
        (jnp.dot(x, w1_ref[...], preferred_element_type=jnp.float32)
         + b1_ref[...]).astype(act_dtype))

    # Fused block-diagonal second layers: one (TB, 2H) MXU matmul.
    # h2[:, :H] == hidden_actor, h2[:, H:] == hidden_critic.
    h2 = jnp.tanh(
        (jnp.dot(h1.astype(w2_ref.dtype), w2_ref[...],
                 preferred_element_type=jnp.float32)
         + b2_ref[...]).astype(act_dtype))

    # Actor output: first H lanes of the fused slab, stored directly
    # (bf16 output by default -> half the writeback bytes).
    actor_ref[...] = h2[:, :hidden].astype(actor_ref.dtype)

    # Value head: wcl is zero-padded over the actor half, so a plain f32 VPU
    # multiply + lane reduction gives hidden_critic @ wcl.T (no 1-lane matmul).
    h2_f32 = h2.astype(jnp.float32)
    value = jnp.sum(h2_f32 * wcl_ref[...], axis=-1, keepdims=True) + bcl_ref[...]
    value_ref[...] = value.astype(value_ref.dtype)


# ----------------------------------------------------------------------------
# Wrapper: batch-tiled pallas_call with resident fused weights, two outputs.
# ----------------------------------------------------------------------------
def _round_up(v, m):
    return ((v + m - 1) // m) * m


def _default_act_dtype():
    """bf16 epilogue on v6e/v7x (bf16 VPU/EUP); f32 elsewhere (e.g. v5e)."""
    try:
        kind = jax.devices()[0].device_kind.lower()
    except Exception:
        return jnp.float32
    if any(tag in kind for tag in ("v6", "v7", "6e", "7x")):
        return jnp.bfloat16
    return jnp.float32


def _choose_tile(n, block_rows):
    # Tiny batches: single full-array block (nothing to pipeline).
    if n <= 32:
        return n
    # Otherwise aim for >= 2 grid steps so v7x's two TensorCores both get
    # work, capped at block_rows (large tiles amortize the ~0.35us per-step
    # pipeline overhead; VMEM use is only ~tile*600B, trivial even at 4096).
    half = _round_up(pl.cdiv(n, 2), 16)
    return max(16, min(block_rows, half))


def mlp_base_forward(x, fused_params, rnn_hxs, *, block_rows=2048,
                     actor_dtype=jnp.bfloat16, act_dtype=None):
    """Pallas-backed MLPBase.forward (non-recurrent).

    x:            (N, num_inputs)  -- any float dtype; cast happens in-kernel
    fused_params: output of fuse_params() (fused / padded weights)
    returns:      (value (N, 1) f32, hidden_actor (N, hidden) actor_dtype,
                   rnn_hxs passed through)
    """
    n, num_inputs = x.shape
    two_h = fused_params["w1"].shape[1]
    hidden = two_h // 2
    if act_dtype is None:
        act_dtype = _default_act_dtype()

    tile = _choose_tile(n, block_rows)
    grid = (pl.cdiv(n, tile),)

    def const(i):                      # weights/biases: resident, never re-DMA'd
        return (0, 0)

    in_specs = [
        pl.BlockSpec((tile, num_inputs), lambda i: (i, 0)),
        pl.BlockSpec(fused_params["w1"].shape, const),
        pl.BlockSpec(fused_params["b1"].shape, const),
        pl.BlockSpec(fused_params["w2"].shape, const),
        pl.BlockSpec(fused_params["b2"].shape, const),
        pl.BlockSpec(fused_params["wcl"].shape, const),
        pl.BlockSpec(fused_params["bcl"].shape, const),
    ]
    out_specs = (
        pl.BlockSpec((tile, hidden), lambda i: (i, 0)),   # actor
        pl.BlockSpec((tile, 1), lambda i: (i, 0)),        # value
    )
    out_shape = (
        jax.ShapeDtypeStruct((n, hidden), actor_dtype),
        jax.ShapeDtypeStruct((n, 1), jnp.float32),
    )

    hidden_actor, value = pl.pallas_call(
        functools.partial(_mlp_base_kernel, act_dtype=act_dtype),
        out_shape=out_shape,
        grid=grid,
        in_specs=in_specs,
        out_specs=out_specs,
        compiler_params=pltpu.CompilerParams(
            dimension_semantics=("parallel",)),   # v7x: split batch over 2 TCs
    )(x, fused_params["w1"], fused_params["b1"], fused_params["w2"],
      fused_params["b2"], fused_params["wcl"], fused_params["bcl"])

    return value, hidden_actor, rnn_hxs


# ----------------------------------------------------------------------------
# Parameter fusion: concat first-layer weights, block-diagonal second layer,
# zero-padded value head.  MXU operands cast to matmul_dtype (bf16 by default);
# biases / value head stay f32.
# ----------------------------------------------------------------------------
def fuse_params(params, matmul_dtype=jnp.bfloat16):
    hidden = params["w2a"].shape[1]
    w1 = jnp.concatenate([params["w1a"], params["w1c"]], axis=1)   # (in, 2H)
    b1 = jnp.concatenate([params["b1a"], params["b1c"]], axis=1)   # (1, 2H)
    w2 = jnp.zeros((2 * hidden, 2 * hidden), jnp.float32)
    w2 = w2.at[:hidden, :hidden].set(params["w2a"])
    w2 = w2.at[hidden:, hidden:].set(params["w2c"])                # block-diag
    b2 = jnp.concatenate([params["b2a"], params["b2c"]], axis=1)   # (1, 2H)
    wcl = jnp.concatenate(
        [jnp.zeros((1, hidden), jnp.float32), params["wcl"]], axis=1)  # (1, 2H)
    return {
        "w1": w1.astype(matmul_dtype),
        "b1": b1.astype(jnp.float32),
        "w2": w2.astype(matmul_dtype),
        "b2": b2.astype(jnp.float32),
        "wcl": wcl.astype(jnp.float32),
        "bcl": params["bcl"].astype(jnp.float32),
    }


# ----------------------------------------------------------------------------
# Deterministic parameter init (mirrors init_: orthogonal weights with
# gain=sqrt(2), zero biases).  Weights are stored as (in, out).
# ----------------------------------------------------------------------------
def _orthogonal(key, n_in, n_out, gain):
    a = jax.random.normal(key, (max(n_in, n_out), min(n_in, n_out)), jnp.float32)
    q, r = jnp.linalg.qr(a)
    q = q * jnp.sign(jnp.diagonal(r))
    if n_in < n_out:
        q = q.T
    return (gain * q[:n_in, :n_out]).astype(jnp.float32)


def init_params(key, num_inputs, hidden_size):
    gain = float(jnp.sqrt(2.0))
    keys = jax.random.split(key, 5)
    return {
        # actor
        "w1a": _orthogonal(keys[0], num_inputs, hidden_size, gain),
        "b1a": jnp.zeros((1, hidden_size), jnp.float32),
        "w2a": _orthogonal(keys[1], hidden_size, hidden_size, gain),
        "b2a": jnp.zeros((1, hidden_size), jnp.float32),
        # critic
        "w1c": _orthogonal(keys[2], num_inputs, hidden_size, gain),
        "b1c": jnp.zeros((1, hidden_size), jnp.float32),
        "w2c": _orthogonal(keys[3], hidden_size, hidden_size, gain),
        "b2c": jnp.zeros((1, hidden_size), jnp.float32),
        # critic_linear head, stored as (1, hidden)
        "wcl": _orthogonal(keys[4], hidden_size, 1, gain).T,
        "bcl": jnp.zeros((1, 1), jnp.float32),
    }


# Pure-JAX reference mirroring the kernel's matmul / activation dtypes.
def _reference(x, p, matmul_dtype, act_dtype):
    def lin(a, w, b):
        return jnp.dot(a.astype(matmul_dtype), w.astype(matmul_dtype),
                       preferred_element_type=jnp.float32) + b
    ha = jnp.tanh(lin(x, p["w1a"], p["b1a"]).astype(act_dtype)).astype(jnp.float32)
    ha = jnp.tanh(lin(ha, p["w2a"], p["b2a"]).astype(act_dtype)).astype(jnp.float32)
    hc = jnp.tanh(lin(x, p["w1c"], p["b1c"]).astype(act_dtype)).astype(jnp.float32)
    hc = jnp.tanh(lin(hc, p["w2c"], p["b2c"]).astype(act_dtype)).astype(jnp.float32)
    value = hc @ p["wcl"].T + p["bcl"]
    return value, ha


if __name__ == "__main__":
    batch = 64
    num_inputs = 32
    hidden_size = 64

    key = jax.random.PRNGKey(0)
    k_x, k_p = jax.random.split(key)

    x = jax.random.normal(k_x, (batch, num_inputs), jnp.float32)
    rnn_hxs = jnp.zeros((batch, 1), jnp.float32)   # recurrent_hidden_state_size == 1
    params = init_params(k_p, num_inputs, hidden_size)

    # --- f32 path (numerically exact model of the PyTorch module): f32 MXU
    # operands, f32 epilogue, f32 actor output; 2-step batch grid.
    fused_f32 = fuse_params(params, matmul_dtype=jnp.float32)
    v32, a32, hxs32 = mlp_base_forward(
        x, fused_f32, rnn_hxs, actor_dtype=jnp.float32, act_dtype=jnp.float32)
    jax.block_until_ready((v32, a32, hxs32))
    ref_v32, ref_a32 = _reference(x, params, jnp.float32, jnp.float32)
    assert v32.shape == (batch, 1)
    assert a32.shape == (batch, hidden_size)
    assert hxs32.shape == rnn_hxs.shape
    assert jnp.allclose(v32, ref_v32, atol=1e-4, rtol=1e-4)
    assert jnp.allclose(a32, ref_a32, atol=1e-4, rtol=1e-4)

    # --- fast path (recommended): bf16 MXU operands, bf16 actor output,
    # generation-appropriate epilogue dtype, 4-step batch grid.
    act = _default_act_dtype()
    fused_bf16 = fuse_params(params, matmul_dtype=jnp.bfloat16)
    v16, a16, hxs16 = mlp_base_forward(x, fused_bf16, rnn_hxs, block_rows=16,
                                       act_dtype=act)
    jax.block_until_ready((v16, a16, hxs16))
    ref_v16, ref_a16 = _reference(x, params, jnp.bfloat16, act)
    assert v16.shape == (batch, 1)
    assert a16.shape == (batch, hidden_size)
    assert a16.dtype == jnp.bfloat16
    assert hxs16.shape == rnn_hxs.shape
    assert jnp.allclose(v16, ref_v16, atol=3e-2, rtol=3e-2)
    assert jnp.allclose(a16.astype(jnp.float32), ref_a16, atol=3e-2, rtol=3e-2)

    print("KERNEL_OK")
</pallas_src>

<mosaic_0001>
module attributes {stable_mosaic.version = 11 : i64} {
  func.func @_mlp_base_kernel(%arg0: i32, %arg1: memref<32x32xf32, #tpu.memory_space<vmem>>, %arg2: memref<32x128xf32, #tpu.memory_space<vmem>>, %arg3: memref<1x128xf32, #tpu.memory_space<vmem>>, %arg4: memref<128x128xf32, #tpu.memory_space<vmem>>, %arg5: memref<1x128xf32, #tpu.memory_space<vmem>>, %arg6: memref<1x128xf32, #tpu.memory_space<vmem>>, %arg7: memref<1x1xf32, #tpu.memory_space<vmem>>, %arg8: memref<32x64xf32, #tpu.memory_space<vmem>>, %arg9: memref<32x1xf32, #tpu.memory_space<vmem>>) attributes {dimension_semantics = [#tpu.dimension_semantics<parallel>], iteration_bounds = array<i64: 2>, scalar_prefetch = 0 : i64, scratch_operands = 0 : i64, tpu.core_type = #tpu.core_type<tc>, window_params = [{transform_indices = @transform_0, window_bounds = array<i64: 32, 32>}, {pipeline_mode = #tpu.pipeline_mode<synchronous>, transform_indices = @transform_1, window_bounds = array<i64: 32, 128>}, {pipeline_mode = #tpu.pipeline_mode<synchronous>, transform_indices = @transform_2, window_bounds = array<i64: 1, 128>}, {pipeline_mode = #tpu.pipeline_mode<synchronous>, transform_indices = @transform_3, window_bounds = array<i64: 128, 128>}, {pipeline_mode = #tpu.pipeline_mode<synchronous>, transform_indices = @transform_4, window_bounds = array<i64: 1, 128>}, {pipeline_mode = #tpu.pipeline_mode<synchronous>, transform_indices = @transform_5, window_bounds = array<i64: 1, 128>}, {pipeline_mode = #tpu.pipeline_mode<synchronous>, transform_indices = @transform_6, window_bounds = array<i64: 1, 1>}, {transform_indices = @transform_7, window_bounds = array<i64: 32, 64>}, {transform_indices = @transform_8, window_bounds = array<i64: 32, 1>}]} {
    %c0 = arith.constant 0 : index
    %c0_0 = arith.constant 0 : index
    %0 = vector.load %arg1[%c0, %c0_0] : memref<32x32xf32, #tpu.memory_space<vmem>>, vector<32x32xf32>
    %c0_1 = arith.constant 0 : index
    %c0_2 = arith.constant 0 : index
    %1 = vector.load %arg2[%c0_1, %c0_2] : memref<32x128xf32, #tpu.memory_space<vmem>>, vector<32x128xf32>
    %cst = arith.constant dense<0.000000e+00> : vector<32x128xf32>
    %2 = tpu.matmul %0, %1, %cst {dimension_numbers = #tpu.dot_dimension_numbers<[1], [0], [0], [1], [0, 0, 1, 1], [], []>} : vector<32x32xf32>, vector<32x128xf32>, vector<32x128xf32> -> vector<32x128xf32>
    %c0_3 = arith.constant 0 : index
    %c0_4 = arith.constant 0 : index
    %3 = vector.load %arg3[%c0_3, %c0_4] : memref<1x128xf32, #tpu.memory_space<vmem>>, vector<1x128xf32>
    %4 = vector.broadcast %3 : vector<1x128xf32> to vector<32x128xf32>
    %5 = arith.addf %2, %4 : vector<32x128xf32>
    %6 = math.tanh %5 : vector<32x128xf32>
    %c0_5 = arith.constant 0 : index
    %c0_6 = arith.constant 0 : index
    %7 = vector.load %arg4[%c0_5, %c0_6] : memref<128x128xf32, #tpu.memory_space<vmem>>, vector<128x128xf32>
    %cst_7 = arith.constant dense<0.000000e+00> : vector<32x128xf32>
    %8 = tpu.matmul %6, %7, %cst_7 {dimension_numbers = #tpu.dot_dimension_numbers<[1], [0], [0], [1], [0, 0, 1, 1], [], []>} : vector<32x128xf32>, vector<128x128xf32>, vector<32x128xf32> -> vector<32x128xf32>
    %c0_8 = arith.constant 0 : index
    %c0_9 = arith.constant 0 : index
    %9 = vector.load %arg5[%c0_8, %c0_9] : memref<1x128xf32, #tpu.memory_space<vmem>>, vector<1x128xf32>
    %10 = vector.broadcast %9 : vector<1x128xf32> to vector<32x128xf32>
    %11 = arith.addf %8, %10 : vector<32x128xf32>
    %12 = math.tanh %11 : vector<32x128xf32>
    %13 = vector.extract_strided_slice %12 {offsets = [0, 0], sizes = [32, 64], strides = [1, 1]} : vector<32x128xf32> to vector<32x64xf32>
    %c0_10 = arith.constant 0 : index
    %c0_11 = arith.constant 0 : index
    %14 = vector.load %arg8[%c0_10, %c0_11] : memref<32x64xf32, #tpu.memory_space<vmem>>, vector<32x64xf32>
    tpu.vector_store %arg8[%c0_10, %c0_11], %13 {strides = array<i32>} : memref<32x64xf32, #tpu.memory_space<vmem>>, vector<32x64xf32>,
    %c0_12 = arith.constant 0 : index
    %c0_13 = arith.constant 0 : index
    %15 = vector.load %arg6[%c0_12, %c0_13] : memref<1x128xf32, #tpu.memory_space<vmem>>, vector<1x128xf32>
    %16 = vector.broadcast %15 : vector<1x128xf32> to vector<32x128xf32>
    %17 = arith.mulf %12, %16 : vector<32x128xf32>
    %cst_14 = arith.constant dense<0.000000e+00> : vector<32xf32>
    %18 = vector.multi_reduction <add>, %17, %cst_14 [1] : vector<32x128xf32> to vector<32xf32>
    %19 = vector.shape_cast %18 : vector<32xf32> to vector<32x1xf32>
    %c0_15 = arith.constant 0 : index
    %c0_16 = arith.constant 0 : index
    %20 = vector.load %arg7[%c0_15, %c0_16] : memref<1x1xf32, #tpu.memory_space<vmem>>, vector<1x1xf32>
    %21 = vector.broadcast %20 : vector<1x1xf32> to vector<32x1xf32>
    %22 = arith.addf %19, %21 : vector<32x1xf32>
    %c0_17 = arith.constant 0 : index
    %c0_18 = arith.constant 0 : index
    %23 = vector.load %arg9[%c0_17, %c0_18] : memref<32x1xf32, #tpu.memory_space<vmem>>, vector<32x1xf32>
    tpu.vector_store %arg9[%c0_17, %c0_18], %22 {strides = array<i32>} : memref<32x1xf32, #tpu.memory_space<vmem>>, vector<32x1xf32>,
    return
  }
  func.func @transform_0(%arg0: i32) -> (i32, i32) {
    %c0_i32 = arith.constant 0 : i32
    %c0_i32_0 = arith.constant 0 : i32
    return %arg0, %c0_i32 : i32, i32
  }
  func.func @transform_1(%arg0: i32) -> (i32, i32) {
    %c0_i32 = arith.constant 0 : i32
    %c0_i32_0 = arith.constant 0 : i32
    %c0_i32_1 = arith.constant 0 : i32
    return %c0_i32, %c0_i32_0 : i32, i32
  }
  func.func @transform_2(%arg0: i32) -> (i32, i32) {
    %c0_i32 = arith.constant 0 : i32
    %c0_i32_0 = arith.constant 0 : i32
    %c0_i32_1 = arith.constant 0 : i32
    return %c0_i32, %c0_i32_0 : i32, i32
  }
  func.func @transform_3(%arg0: i32) -> (i32, i32) {
    %c0_i32 = arith.constant 0 : i32
    %c0_i32_0 = arith.constant 0 : i32
    %c0_i32_1 = arith.constant 0 : i32
    return %c0_i32, %c0_i32_0 : i32, i32
  }
  func.func @transform_4(%arg0: i32) -> (i32, i32) {
    %c0_i32 = arith.constant 0 : i32
    %c0_i32_0 = arith.constant 0 : i32
    %c0_i32_1 = arith.constant 0 : i32
    return %c0_i32, %c0_i32_0 : i32, i32
  }
  func.func @transform_5(%arg0: i32) -> (i32, i32) {
    %c0_i32 = arith.constant 0 : i32
    %c0_i32_0 = arith.constant 0 : i32
    %c0_i32_1 = arith.constant 0 : i32
    return %c0_i32, %c0_i32_0 : i32, i32
  }
  func.func @transform_6(%arg0: i32) -> (i32, i32) {
    %c0_i32 = arith.constant 0 : i32
    %c0_i32_0 = arith.constant 0 : i32
    %c0_i32_1 = arith.constant 0 : i32
    return %c0_i32, %c0_i32_0 : i32, i32
  }
  func.func @transform_7(%arg0: i32) -> (i32, i32) {
    %c0_i32 = arith.constant 0 : i32
    %c0_i32_0 = arith.constant 0 : i32
    return %arg0, %c0_i32 : i32, i32
  }
  func.func @transform_8(%arg0: i32) -> (i32, i32) {
    %c0_i32 = arith.constant 0 : i32
    %c0_i32_0 = arith.constant 0 : i32
    return %arg0, %c0_i32 : i32, i32
  }
}

</mosaic_0001>

<llo_original>
// kernel: tpu_custom_call.1
$region0: #{tpu_custom_call.1}
  #allocation0 [shape = 'u32[]', space=smem, size = 0x4, offset = 0x4, fixed_abs, tag = 'smem constant byte address 0x4 - core index']
  #allocation1 [shape = 'u32[72,128]{1,0:T(1,128)}', space=vmem, size = 0x9000, scoped, tag = 'internal scratch']
  #allocation2 [shape = 'f32[1,1]{1,0:T(1,128)S(1)}', space=vmem, size = 0x200, scoped, tag = 'scoped memory for tpu_custom_call.1']
  %s0 = inlined_call_operand.vmem [shape: f32[64,32], index: 0, kind: input, shape index: {}]
  %s1 = inlined_call_operand.vmem [shape: f32[32,128], index: 1, kind: input, shape index: {}]
  %s2 = inlined_call_operand.vmem [shape: f32[1,128], index: 2, kind: input, shape index: {}]
  %s3 = inlined_call_operand.hbm [shape: f32[128,128], index: 3, kind: input, shape index: {}]
  %s4 = inlined_call_operand.vmem [shape: f32[1,128], index: 4, kind: input, shape index: {}]
  %s5 = inlined_call_operand.vmem [shape: f32[1,128], index: 5, kind: input, shape index: {}]
  %s6 = inlined_call_operand.<no memory space> [shape: f32[1,1], index: 6, kind: input, shape index: {}]
  %s7 = inlined_call_operand.hbm [shape: f32[64,64], index: 7, kind: output, shape index: {0}]
  %s8 = inlined_call_operand.vmem [shape: f32[64,1], index: 8, kind: output, shape index: {1}]
  %9 = xla_tuple %s7, %s8
  %s10 = sld [smem:[#allocation0]]
  $region73: #{tpu_custom_call.1} parent=0
    _
  %s12 = ssub.s32 1, %s10
  %s13 = scalar_select 0, %s12, %s10
  %v14 = vstv %s6
  %15 = vst [vmem:[#allocation2] sm:$0x1] %v14
  $region1: #{tpu_custom_call.1} parent=0
    #allocation3 [shape = 'u8[65536]{0}', space=vmem, size = 0x10000, scoped, tag = 'input window, operand 3, single buffered']
    #allocation4 [shape = 's32[2]{0}', space=sflag, size = 0x8, scoped, tag = 'scoped memory for tpu_custom_call.1']
    #allocation5 [shape = 's32[2]{0}', space=sflag, size = 0x8, scoped, tag = 'scoped memory for tpu_custom_call.1']
    #allocation6 [shape = 'u8[32768]{0}', space=vmem, size = 0x8000, scoped, tag = 'output window, operand 0']
    %16 = vsyncpa [#allocation4], 0
    %17 = vsyncpa [#allocation5], 0
    %s18 = scalar_lea.sflag [#allocation5], 1
    %19 = vsyncpa %s18, 0
    loop: start=0, step=1, limit=4
    $region2: #{tpu_custom_call.1} parent=1 // loop_pre_header
      _
    $region3: #{tpu_custom_call.1} parent=1 // loop_header
      %s21 = sphi 0, %s25
      %p22 = scmp.ge.s32.totalorder %s21, 4
      %s31 = sphi 0, %s33
      %s34 = sphi 0, %s31
      %s35 = sphi 0, %s34
      %s51 = sphi 0, %s35
      %s55 = sphi 0, %s55
      %s57 = sphi 0, %s55
      %s58 = sphi 0, %s57
      %s72 = sphi 0, %s58
      %s76 = sphi 0, %s76
      %s78 = sphi 0, %s76
      %s79 = sphi 0, %s78
      %s93 = sphi 0, %s79
      %s97 = sphi 0, %s97
      %s99 = sphi 0, %s97
      %s100 = sphi 0, %s99
      %s114 = sphi 0, %s100
      %s118 = sphi 0, %s118
      %s120 = sphi 0, %s118
      %s121 = sphi 0, %s120
      %s135 = sphi 0, %s121
      %s139 = sphi 0, %s139
      %s141 = sphi 0, %s139
      %s142 = sphi 0, %s141
      %s156 = sphi 0, %s142
      %s160 = sphi 0, %s160
      %s162 = sphi 0, %s160
      %s163 = sphi 0, %s162
      %s177 = sphi 0, %s163
      %s183 = sphi 0, %s185
      %s186 = sphi 0, %s183
      %s187 = sphi 0, %s186
      %s203 = sphi 0, %s187
      %s209 = sphi 0, %s211
      %s212 = sphi 0, %s209
      %s213 = sphi 0, %s212
      %s229 = sphi 0, %s213
    $region4: #{tpu_custom_call.1} parent=1 // loop_header_branch
      %24 = sbr.rel (%p22) target = $region8
    $region5: #{tpu_custom_call.1} parent=1 // loop_body
      %s26 = ssub.s32 %s21, 1
      %s27 = ssub.s32 %s21, 2
      %s28 = sadd.s32 %s21, 1
      %s29 = ssub.s32 %s21, %s28
      %p30 = scmp.eq.s32.totalorder %s29, 0
      %s32 = sadd.s32 %s31, 1
      %s33 = scalar_select %p30, %s31, %s32
      %p36 = pneg %p30
      %p37 = scmp.eq.s32.totalorder %s21, 1
      %p38 = por %p36, %p37
      %p39 = scmp.ne.s32.totalorder %s31, %s34
      %p40 = scmp.eq.s32.totalorder %s21, 0
      %p41 = por %p39, %p40
      %p42 = scmp.ne.s32.totalorder %s31, %s34
      %p43 = scmp.eq.s32.totalorder %s26, 1
      %p44 = por %p42, %p43
      %p45 = scmp.ne.s32.totalorder %s34, %s35
      %p46 = scmp.eq.s32.totalorder %s26, 0
      %p47 = por %p45, %p46
      %p48 = scmp.ne.s32.totalorder %s34, %s35
      %p49 = scmp.eq.s32.totalorder %s27, 1
      %p50 = por %p48, %p49
      %p52 = scmp.ne.s32.totalorder %s35, %s51
      %p53 = scmp.eq.s32.totalorder %s27, 0
      %p54 = por %p52, %p53
      %s56 = sadd.s32 %s55, 1
      %p59 = scmp.eq.s32.totalorder %s21, 1
      %p60 = scmp.ne.s32.totalorder %s55, %s57
      %p61 = scmp.eq.s32.totalorder %s21, 0
      %p62 = por %p60, %p61
      %p63 = scmp.ne.s32.totalorder %s55, %s57
      %p64 = scmp.eq.s32.totalorder %s26, 1
      %p65 = por %p63, %p64
      %p66 = scmp.ne.s32.totalorder %s57, %s58
      %p67 = scmp.eq.s32.totalorder %s26, 0
      %p68 = por %p66, %p67
      %p69 = scmp.ne.s32.totalorder %s57, %s58
      %p70 = scmp.eq.s32.totalorder %s27, 1
      %p71 = por %p69, %p70
      %p73 = scmp.ne.s32.totalorder %s58, %s72
      %p74 = scmp.eq.s32.totalorder %s27, 0
      %p75 = por %p73, %p74
      %s77 = sadd.s32 %s76, 1
      %p80 = scmp.eq.s32.totalorder %s21, 1
      %p81 = scmp.ne.s32.totalorder %s76, %s78
      %p82 = scmp.eq.s32.totalorder %s21, 0
      %p83 = por %p81, %p82
      %p84 = scmp.ne.s32.totalorder %s76, %s78
      %p85 = scmp.eq.s32.totalorder %s26, 1
      %p86 = por %p84, %p85
      %p87 = scmp.ne.s32.totalorder %s78, %s79
      %p88 = scmp.eq.s32.totalorder %s26, 0
      %p89 = por %p87, %p88
      %p90 = scmp.ne.s32.totalorder %s78, %s79
      %p91 = scmp.eq.s32.totalorder %s27, 1
      %p92 = por %p90, %p91
      %p94 = scmp.ne.s32.totalorder %s79, %s93
      %p95 = scmp.eq.s32.totalorder %s27, 0
      %p96 = por %p94, %p95
      %s98 = sadd.s32 %s97, 1
      %p101 = scmp.eq.s32.totalorder %s21, 1
      %p102 = scmp.ne.s32.totalorder %s97, %s99
      %p103 = scmp.eq.s32.totalorder %s21, 0
      %p104 = por %p102, %p103
      %p105 = scmp.ne.s32.totalorder %s97, %s99
      %p106 = scmp.eq.s32.totalorder %s26, 1
      %p107 = por %p105, %p106
      %p108 = scmp.ne.s32.totalorder %s99, %s100
      %p109 = scmp.eq.s32.totalorder %s26, 0
      %p110 = por %p108, %p109
      %p111 = scmp.ne.s32.totalorder %s99, %s100
      %p112 = scmp.eq.s32.totalorder %s27, 1
      %p113 = por %p111, %p112
      %p115 = scmp.ne.s32.totalorder %s100, %s114
      %p116 = scmp.eq.s32.totalorder %s27, 0
      %p117 = por %p115, %p116
      %s119 = sadd.s32 %s118, 1
      %p122 = scmp.eq.s32.totalorder %s21, 1
      %p123 = scmp.ne.s32.totalorder %s118, %s120
      %p124 = scmp.eq.s32.totalorder %s21, 0
      %p125 = por %p123, %p124
      %p126 = scmp.ne.s32.totalorder %s118, %s120
      %p127 = scmp.eq.s32.totalorder %s26, 1
      %p128 = por %p126, %p127
      %p129 = scmp.ne.s32.totalorder %s120, %s121
      %p130 = scmp.eq.s32.totalorder %s26, 0
      %p131 = por %p129, %p130
      %p132 = scmp.ne.s32.totalorder %s120, %s121
      %p133 = scmp.eq.s32.totalorder %s27, 1
      %p134 = por %p132, %p133
      %p136 = scmp.ne.s32.totalorder %s121, %s135
      %p137 = scmp.eq.s32.totalorder %s27, 0
      %p138 = por %p136, %p137
      %s140 = sadd.s32 %s139, 1
      %p143 = scmp.eq.s32.totalorder %s21, 1
      %p144 = scmp.ne.s32.totalorder %s139, %s141
      %p145 = scmp.eq.s32.totalorder %s21, 0
      %p146 = por %p144, %p145
      %p147 = scmp.ne.s32.totalorder %s139, %s141
      %p148 = scmp.eq.s32.totalorder %s26, 1
      %p149 = por %p147, %p148
      %p150 = scmp.ne.s32.totalorder %s141, %s142
      %p151 = scmp.eq.s32.totalorder %s26, 0
      %p152 = por %p150, %p151
      %p153 = scmp.ne.s32.totalorder %s141, %s142
      %p154 = scmp.eq.s32.totalorder %s27, 1
      %p155 = por %p153, %p154
      %p157 = scmp.ne.s32.totalorder %s142, %s156
      %p158 = scmp.eq.s32.totalorder %s27, 0
      %p159 = por %p157, %p158
      %s161 = sadd.s32 %s160, 1
      %p164 = scmp.eq.s32.totalorder %s21, 1
      %p165 = scmp.ne.s32.totalorder %s160, %s162
      %p166 = scmp.eq.s32.totalorder %s21, 0
      %p167 = por %p165, %p166
      %p168 = scmp.ne.s32.totalorder %s160, %s162
      %p169 = scmp.eq.s32.totalorder %s26, 1
      %p170 = por %p168, %p169
      %p171 = scmp.ne.s32.totalorder %s162, %s163
      %p172 = scmp.eq.s32.totalorder %s26, 0
      %p173 = por %p171, %p172
      %p174 = scmp.ne.s32.totalorder %s162, %s163
      %p175 = scmp.eq.s32.totalorder %s27, 1
      %p176 = por %p174, %p175
      %p178 = scmp.ne.s32.totalorder %s163, %s177
      %p179 = scmp.eq.s32.totalorder %s27, 0
      %p180 = por %p178, %p179
      %s181 = ssub.s32 %s21, %s28
      %p182 = scmp.eq.s32.totalorder %s181, 0
      %s184 = sadd.s32 %s183, 1
      %s185 = scalar_select %p182, %s183, %s184
      %p188 = pneg %p182
      %p189 = scmp.eq.s32.totalorder %s21, 1
      %p190 = por %p188, %p189
      %p191 = scmp.ne.s32.totalorder %s183, %s186
      %p192 = scmp.eq.s32.totalorder %s21, 0
      %p193 = por %p191, %p192
      %p194 = scmp.ne.s32.totalorder %s183, %s186
      %p195 = scmp.eq.s32.totalorder %s26, 1
      %p196 = por %p194, %p195
      %p197 = scmp.ne.s32.totalorder %s186, %s187
      %p198 = scmp.eq.s32.totalorder %s26, 0
      %p199 = por %p197, %p198
      %p200 = scmp.ne.s32.totalorder %s186, %s187
      %p201 = scmp.eq.s32.totalorder %s27, 1
      %p202 = por %p200, %p201
      %p204 = scmp.ne.s32.totalorder %s187, %s203
      %p205 = scmp.eq.s32.totalorder %s27, 0
      %p206 = por %p204, %p205
      %s207 = ssub.s32 %s21, %s28
      %p208 = scmp.eq.s32.totalorder %s207, 0
      %s210 = sadd.s32 %s209, 1
      %s211 = scalar_select %p208, %s209, %s210
      %p214 = pneg %p208
      %p215 = scmp.eq.s32.totalorder %s21, 1
      %p216 = por %p214, %p215
      %p217 = scmp.ne.s32.totalorder %s209, %s212
      %p218 = scmp.eq.s32.totalorder %s21, 0
      %p219 = por %p217, %p218
      %p220 = scmp.ne.s32.totalorder %s209, %s212
      %p221 = scmp.eq.s32.totalorder %s26, 1
      %p222 = por %p220, %p221
      %p223 = scmp.ne.s32.totalorder %s212, %s213
      %p224 = scmp.eq.s32.totalorder %s26, 0
      %p225 = por %p223, %p224
      %p226 = scmp.ne.s32.totalorder %s212, %s213
      %p227 = scmp.eq.s32.totalorder %s27, 1
      %p228 = por %p226, %p227
      %p230 = scmp.ne.s32.totalorder %s213, %s229
      %p231 = scmp.eq.s32.totalorder %s27, 0
      %p232 = por %p230, %p231
      %p233 = scmp.le.s32.totalorder 1, %s21
      %p234 = scmp.lt.s32.totalorder %s21, 3
      %p235 = pnand %p233, %p234
      %p236 = pneg %p235
      // Predicated region
      $region9: #{tpu_custom_call.1} parent=5 // pred_check
        _
      $region10: #{tpu_custom_call.1} parent=5 // pred_check_branch
        %238 = sbr.rel (%p235) target = $region12
      $region11: #{tpu_custom_call.1} parent=5 // pred_region
        %s239 = ssub.s32 %s21, 1
        // Predicated region
        $region13: #{tpu_custom_call.1} parent=11 // pred_check
          %p240 = pneg %p68
        $region14: #{tpu_custom_call.1} parent=11 // pred_check_branch
          %242 = sbr.rel (%p240) target = $region16
        $region15: #{tpu_custom_call.1} parent=11 // pred_region
          _
        $region16: #{tpu_custom_call.1} parent=11 // pred_fallthru
          _
        // Predicated region
        $region17: #{tpu_custom_call.1} parent=11 // pred_check
          %p243 = pneg %p89
        $region18: #{tpu_custom_call.1} parent=11 // pred_check_branch
          %245 = sbr.rel (%p243) target = $region20
        $region19: #{tpu_custom_call.1} parent=11 // pred_region
          _
        $region20: #{tpu_custom_call.1} parent=11 // pred_fallthru
          _
        // Predicated region
        $region21: #{tpu_custom_call.1} parent=11 // pred_check
          %p246 = pneg %p110
        $region22: #{tpu_custom_call.1} parent=11 // pred_check_branch
          %248 = sbr.rel (%p246) target = $region24
        $region23: #{tpu_custom_call.1} parent=11 // pred_region
          %250 = vsyncadd [#allocation4], 0
          %s251 = sshll.u32 %s3, 4
          %s252 = int_to_ptr.hbm [resolvable:$true] %s251
          %s253 = sshll.u32 [#allocation3], 4
          %s254 = int_to_ptr.vmem [resolvable:$true] %s253
          %259 = dma.hbm_to_vmem [thread:$0]  %s252, 2048, %s254, [#allocation4], 128, 128, 8
        $region24: #{tpu_custom_call.1} parent=11 // pred_fallthru
          _
        // Predicated region
        $region25: #{tpu_custom_call.1} parent=11 // pred_check
          %p260 = pneg %p131
        $region26: #{tpu_custom_call.1} parent=11 // pred_check_branch
          %262 = sbr.rel (%p260) target = $region28
        $region27: #{tpu_custom_call.1} parent=11 // pred_region
          _
        $region28: #{tpu_custom_call.1} parent=11 // pred_fallthru
          _
        // Predicated region
        $region29: #{tpu_custom_call.1} parent=11 // pred_check
          %p263 = pneg %p152
        $region30: #{tpu_custom_call.1} parent=11 // pred_check_branch
          %265 = sbr.rel (%p263) target = $region32
        $region31: #{tpu_custom_call.1} parent=11 // pred_region
          _
        $region32: #{tpu_custom_call.1} parent=11 // pred_fallthru
          _
        // Predicated region
        $region33: #{tpu_custom_call.1} parent=11 // pred_check
          %p266 = pneg %p173
        $region34: #{tpu_custom_call.1} parent=11 // pred_check_branch
          %268 = sbr.rel (%p266) target = $region36
        $region35: #{tpu_custom_call.1} parent=11 // pred_region
          _
        $region36: #{tpu_custom_call.1} parent=11 // pred_fallthru
          _
      $region12: #{tpu_custom_call.1} parent=5 // pred_fallthru
        _
      %p269 = scmp.lt.s32.totalorder %s21, 2
      // Predicated region
      $region37: #{tpu_custom_call.1} parent=5 // pred_check
        %p270 = pneg %p269
      $region38: #{tpu_custom_call.1} parent=5 // pred_check_branch
        %272 = sbr.rel (%p270) target = $region40
      $region39: #{tpu_custom_call.1} parent=5 // pred_region
        // Predicated region
        $region41: #{tpu_custom_call.1} parent=39 // pred_check
          %p273 = pneg %p41
        $region42: #{tpu_custom_call.1} parent=39 // pred_check_branch
          %275 = sbr.rel (%p273) target = $region44
        $region43: #{tpu_custom_call.1} parent=39 // pred_region
          %s276 = smul.u32 4, %s21
          %p277 = scmp.lt.s32.totalorder %s276, 7
          %s278 = scalar_select %p277, %s276, 7
          %s279 = smul.addr %s278, 8
          %s280 = scalar_lea.vmem %s0, %s279
          %s281 = smul.u32 4, %s21
        $region44: #{tpu_custom_call.1} parent=39 // pred_fallthru
          _
      $region40: #{tpu_custom_call.1} parent=5 // pred_fallthru
        _
      %p282 = scmp.le.s32.totalorder 1, %s21
      %p283 = scmp.lt.s32.totalorder %s21, 3
      %p284 = pnand %p282, %p283
      %p285 = pneg %p284
      // Predicated region
      $region45: #{tpu_custom_call.1} parent=5 // pred_check
        _
      $region46: #{tpu_custom_call.1} parent=5 // pred_check_branch
        %287 = sbr.rel (%p284) target = $region48
      $region47: #{tpu_custom_call.1} parent=5 // pred_region
        %s288 = ssub.s32 %s21, 1
        // Predicated region
        $region49: #{tpu_custom_call.1} parent=47 // pred_check
          %p289 = pneg %p110
        $region50: #{tpu_custom_call.1} parent=47 // pred_check_branch
          %291 = sbr.rel (%p289) target = $region52
        $region51: #{tpu_custom_call.1} parent=47 // pred_region
          %293 = dma.done [#allocation4], 2048
        $region52: #{tpu_custom_call.1} parent=47 // pred_fallthru
          _
        %s294 = smul.u32 4, %s26
        %p295 = scmp.lt.s32.totalorder %s294, 7
        %s296 = scalar_select %p295, %s294, 7
        %s297 = smul.addr %s296, 8
        %s298 = scalar_lea.vmem %s0, %s297
        %p299 = pneg %p47
        %p300 = pneg %p44
        %p301 = pneg %p68
        %p302 = pneg %p65
        %p303 = pneg %p89
        %p304 = pneg %p86
        %p305 = pneg %p110
        %p306 = pneg %p107
        %p307 = pneg %p131
        %p308 = pneg %p128
        %p309 = pneg %p152
        %p310 = pneg %p149
        %p311 = pneg %p173
        %p312 = pneg %p170
        %p313 = pneg %p199
        %p314 = pneg %p196
        %s315 = sand.u32 %s186, 1
        %s316 = scalar_lea.sflag [#allocation5], %s315
        %s317 = sand.u32 %s186, 1
        %s318 = smul.addr %s317, 32
        %s319 = scalar_lea.vmem [#allocation6], %s318
        %p320 = pneg %p225
        %p321 = pneg %p222
        %s322 = smul.u32 4, %s26
        %p323 = scmp.lt.s32.totalorder %s322, 7
        %s324 = scalar_select %p323, %s322, 7
        %s325 = smul.addr %s324, 8
        %s326 = scalar_lea.vmem %s8, %s325
        %s327 = smul.u32 4, %s26
        %p328 = scmp.lt.s32.totalorder %s327, 7
        %s329 = scalar_select %p328, %s327, 7
        %s330 = smul.addr %s329, 8
        %s331 = scalar_lea.vmem %s0, %s330
        %s332 = smul.u32 4, %s26
        %s333 = smul.u32 4, %s26
        %s334 = smul.u32 4, %s26
        %p335 = scmp.lt.s32.totalorder %s334, 7
        %s336 = scalar_select %p335, %s334, 7
        %s337 = smul.addr %s336, 8
        %s338 = scalar_lea.vmem %s8, %s337
        %s339 = smul.u32 4, %s26
        %v340 = vld [vmem:[%s331] sm:$0xff]
        %v341 = vld [vmem:[%s331 + $0x8] sm:$0xff]
        %v342 = vld [vmem:[%s331 + $0x10] sm:$0xff]
        %v343 = vld [vmem:[%s331 + $0x18] sm:$0xff]
        %v344 = vld [vmem:[%s1] sm:$0xff]
        %v345 = vld [vmem:[%s1 + $0x8] sm:$0xff]
        %v346 = vld [vmem:[%s1 + $0x10] sm:$0xff]
        %v347 = vld [vmem:[%s1 + $0x18] sm:$0xff]
        %v348 = vld [vmem:[%s2] sm:$0x1]
        %v350 = vperm.slane %v348, 0
        %vm352 = vcmask 261120
        %v354 = vsel %vm352, %v340, 0
        %v357 = vsel %vm352, %v341, 0
        %v360 = vsel %vm352, %v342, 0
        %v363 = vsel %vm352, %v343, 0
        %365 = vmatpush.msra.mxu0 0.0
        %366 = vmatpush.msra.mxu0 0.0
        %367 = vmatpush.msra.mxu0 0.0
        %368 = vmatpush.msra.mxu0 0.0
        %369 = vmatpush.msra.mxu0 0.0
        %370 = vmatpush.msra.mxu0 0.0
        %371 = vmatpush.msra.mxu0 0.0
        %372 = vmatpush.msra.mxu0 0.0
        %373 = vmatpush.msra.mxu0 0.0
        %374 = vmatpush.msra.mxu0 0.0
        %375 = vmatpush.msra.mxu0 0.0
        %376 = vmatpush.msra.mxu0 0.0
        %377 = vmatpush.msra.mxu0 %v347
        %378 = vmatpush.msra.mxu0 %v346
        %379 = vmatpush.msra.mxu0 %v345
        %380 = vmatpush.msra.mxu0 %v344
        %381 = vmatmul.f32.gmra.mxu0 %v354
        %v382 = vpop.f32.mrf.mxu0
        %v383 = vadd.f32 %v350, %v382
        %384 = vmatmul.f32.gmra.mxu0 %v357
        %v385 = vpop.f32.mrf.mxu0
        %v386 = vadd.f32 %v350, %v385
        %387 = vmatmul.f32.gmra.mxu0 %v360
        %v388 = vpop.f32.mrf.mxu0
        %v389 = vadd.f32 %v350, %v388
        %390 = vmatmul.f32.gmra.mxu0 %v363
        %v391 = vpop.f32.mrf.mxu0
        %v392 = vadd.f32 %v350, %v391
        %393 = vdwg.mxu0
        %v394 = vtanh.pop %v383
        %v395 = vtanh.pop %v386
        %v396 = vtanh.pop %v389
        %v397 = vtanh.pop %v392
        %v398 = vld [vmem:[#allocation3] sm:$0xff]
        %v399 = vld [vmem:[#allocation3 + $0x8] sm:$0xff]
        %v400 = vld [vmem:[#allocation3 + $0x10] sm:$0xff]
        %v401 = vld [vmem:[#allocation3 + $0x18] sm:$0xff]
        %v402 = vld [vmem:[#allocation3 + $0x20] sm:$0xff]
        %v403 = vld [vmem:[#allocation3 + $0x28] sm:$0xff]
        %v404 = vld [vmem:[#allocation3 + $0x30] sm:$0xff]
        %v405 = vld [vmem:[#allocation3 + $0x38] sm:$0xff]
        %v406 = vld [vmem:[#allocation3 + $0x40] sm:$0xff]
        %v407 = vld [vmem:[#allocation3 + $0x48] sm:$0xff]
        %v408 = vld [vmem:[#allocation3 + $0x50] sm:$0xff]
        %v409 = vld [vmem:[#allocation3 + $0x58] sm:$0xff]
        %v410 = vld [vmem:[#allocation3 + $0x60] sm:$0xff]
        %v411 = vld [vmem:[#allocation3 + $0x68] sm:$0xff]
        %v412 = vld [vmem:[#allocation3 + $0x70] sm:$0xff]
        %v413 = vld [vmem:[#allocation3 + $0x78] sm:$0xff]
        %v414 = vld [vmem:[%s4] sm:$0x1]
        %v416 = vperm.slane %v414, 0
        %418 = vmatpush.msra.mxu0 %v413
        %419 = vmatpush.msra.mxu0 %v412
        %420 = vmatpush.msra.mxu0 %v411
        %421 = vmatpush.msra.mxu0 %v410
        %422 = vmatpush.msra.mxu0 %v409
        %423 = vmatpush.msra.mxu0 %v408
        %424 = vmatpush.msra.mxu0 %v407
        %425 = vmatpush.msra.mxu0 %v406
        %426 = vmatpush.msra.mxu0 %v405
        %427 = vmatpush.msra.mxu0 %v404
        %428 = vmatpush.msra.mxu0 %v403
        %429 = vmatpush.msra.mxu0 %v402
        %430 = vmatpush.msra.mxu0 %v401
        %431 = vmatpush.msra.mxu0 %v400
        %432 = vmatpush.msra.mxu0 %v399
        %433 = vmatpush.msra.mxu0 %v398
        %434 = vmatmul.f32.gmra.mxu0 %v394
        %v435 = vpop.f32.mrf.mxu0
        %v436 = vadd.f32 %v416, %v435
        %437 = vmatmul.f32.gmra.mxu0 %v395
        %v438 = vpop.f32.mrf.mxu0
        %v439 = vadd.f32 %v416, %v438
        %440 = vmatmul.f32.gmra.mxu0 %v396
        %v441 = vpop.f32.mrf.mxu0
        %v442 = vadd.f32 %v416, %v441
        %443 = vmatmul.f32.gmra.mxu0 %v397
        %v444 = vpop.f32.mrf.mxu0
        %v445 = vadd.f32 %v416, %v444
        %446 = vdwg.mxu0
        %v447 = vtanh.pop %v436
        %v448 = vtanh.pop %v439
        %v449 = vtanh.pop %v442
        %v450 = vtanh.pop %v445
        %vm451 = vcmask 523264
        %452 = vst.msk [vmem:[%s319] sm:$0xff] %vm451, %v447
        %453 = vst.msk [vmem:[%s319 + $0x8] sm:$0xff] %vm451, %v448
        %454 = vst.msk [vmem:[%s319 + $0x10] sm:$0xff] %vm451, %v449
        %455 = vst.msk [vmem:[%s319 + $0x18] sm:$0xff] %vm451, %v450
        %v456 = vld [vmem:[%s5] sm:$0x1]
        %v458 = vperm.slane %v456, 0
        %v460 = vmul.f32 %v447, %v458
        %v461 = vmul.f32 %v448, %v458
        %v462 = vmul.f32 %v449, %v458
        %v463 = vmul.f32 %v450, %v458
        %464 = vadd.xlane.f32.xlu0 %v460
        %v465 = vpop.xlane.xlu0 %464
        %466 = vadd.xlane.f32.xlu0 %v461
        %v467 = vpop.xlane.xlu0 %466
        %468 = vadd.xlane.f32.xlu0 %v462
        %v469 = vpop.xlane.xlu0 %468
        %470 = vadd.xlane.f32.xlu0 %v463
        %v471 = vpop.xlane.xlu0 %470
        %v472 = vld [vmem:[#allocation2] sm:$0x1]
        %v474 = vperm.slane %v472, 0
        %v476 = vadd.f32 %v465, %v474
        %v477 = vadd.f32 %v467, %v474
        %v478 = vadd.f32 %v469, %v474
        %v479 = vadd.f32 %v471, %v474
        %vm480 = vcmask 7168
        %481 = vst.msk [vmem:[%s338] sm:$0xff] %vm480, %v476
        %482 = vst.msk [vmem:[%s338 + $0x8] sm:$0xff] %vm480, %v477
        %483 = vst.msk [vmem:[%s338 + $0x10] sm:$0xff] %vm480, %v478
        %484 = vst.msk [vmem:[%s338 + $0x18] sm:$0xff] %vm480, %v479
        %s485 = sand.u32 %s186, 1
        %s486 = scalar_lea.sflag [#allocation5], %s485
        %s487 = sand.u32 %s186, 1
        %s488 = smul.addr %s487, 32
        %s489 = scalar_lea.vmem [#allocation6], %s488
        %s490 = smul.u32 4, %s26
        %p491 = scmp.lt.s32.totalorder %s490, 7
        %s492 = scalar_select %p491, %s490, 7
        %s493 = smul.addr %s492, 8
        %s494 = scalar_lea.vmem %s8, %s493
        // Predicated region
        $region53: #{tpu_custom_call.1} parent=47 // pred_check
          %p495 = pneg %p196
        $region54: #{tpu_custom_call.1} parent=47 // pred_check_branch
          %497 = sbr.rel (%p495) target = $region56
        $region55: #{tpu_custom_call.1} parent=47 // pred_region
          %s498 = smul.u32 4, %s26
          %500 = vsyncadd %s486, 0
          %s501 = smul.addr %s498, 8
          %s502 = scalar_lea.hbm %s7, %s501
          %s503 = sshll.u32 %s489, 4
          %s504 = int_to_ptr.vmem [resolvable:$true] %s503
          %s505 = sshll.u32 %s502, 4
          %s506 = int_to_ptr.hbm [resolvable:$true] %s505
          %511 = dma.vmem_to_hbm [thread:$0]  %s504, 512, %s506, %s486, 128, 128, 8
        $region56: #{tpu_custom_call.1} parent=47 // pred_fallthru
          _
        // Predicated region
        $region57: #{tpu_custom_call.1} parent=47 // pred_check
          %p512 = pneg %p222
        $region58: #{tpu_custom_call.1} parent=47 // pred_check_branch
          %514 = sbr.rel (%p512) target = $region60
        $region59: #{tpu_custom_call.1} parent=47 // pred_region
          %s515 = smul.u32 4, %s26
        $region60: #{tpu_custom_call.1} parent=47 // pred_fallthru
          _
      $region48: #{tpu_custom_call.1} parent=5 // pred_fallthru
        _
      %p516 = scmp.le.s32.totalorder 2, %s21
      // Predicated region
      $region61: #{tpu_custom_call.1} parent=5 // pred_check
        %p517 = pneg %p516
      $region62: #{tpu_custom_call.1} parent=5 // pred_check_branch
        %519 = sbr.rel (%p517) target = $region64
      $region63: #{tpu_custom_call.1} parent=5 // pred_region
        %s520 = ssub.s32 %s21, 2
        // Predicated region
        $region65: #{tpu_custom_call.1} parent=63 // pred_check
          %p521 = pneg %p202
        $region66: #{tpu_custom_call.1} parent=63 // pred_check_branch
          %523 = sbr.rel (%p521) target = $region68
        $region67: #{tpu_custom_call.1} parent=63 // pred_region
          %s524 = sand.u32 %s187, 1
          %s525 = scalar_lea.sflag [#allocation5], %s524
          %s526 = sand.u32 %s187, 1
          %s527 = smul.addr %s526, 32
          %s528 = scalar_lea.vmem [#allocation6], %s527
          %530 = dma.done %s525, 512
        $region68: #{tpu_custom_call.1} parent=63 // pred_fallthru
          _
        // Predicated region
        $region69: #{tpu_custom_call.1} parent=63 // pred_check
          %p531 = pneg %p228
        $region70: #{tpu_custom_call.1} parent=63 // pred_check_branch
          %533 = sbr.rel (%p531) target = $region72
        $region71: #{tpu_custom_call.1} parent=63 // pred_region
          %s534 = smul.u32 4, %s27
          %p535 = scmp.lt.s32.totalorder %s534, 7
          %s536 = scalar_select %p535, %s534, 7
          %s537 = smul.addr %s536, 8
          %s538 = scalar_lea.vmem %s8, %s537
        $region72: #{tpu_custom_call.1} parent=63 // pred_fallthru
          _
      $region64: #{tpu_custom_call.1} parent=5 // pred_fallthru
        _
    $region6: #{tpu_custom_call.1} parent=1 // loop_footer
      %s25 = sadd.s32 1, %s21
    $region7: #{tpu_custom_call.1} parent=1 // loop_footer_branch
      %20 = sbr.rel target = $region3
    $region8: #{tpu_custom_call.1} parent=1 // loop_exit
      _
    %539 = vsyncpa [#allocation4], 1
    %s540 = scalar_lea.sflag [#allocation4], 1
    %541 = vsyncpa %s540, 1
    %542 = vsyncpa [#allocation5], 1
    %s543 = scalar_lea.sflag [#allocation5], 1
    %544 = vsyncpa %s543, 1

</llo_original>
